<compile_context>
chip_gen: v5e
topology: v5e:2x2
jax: 0.10.0
libtpu: 0.0.40
codegen_flags: <defaults>
</compile_context>

<pallas_src>
import jax
import jax.numpy as jnp
from jax.experimental import pallas as pl
from jax.experimental.pallas import tpu as pltpu

LAYER_DIMS = [128, 64, 32, 16, 8, 4, 2]          # 6 Linear layers
IN_DIMS = LAYER_DIMS[:-1]                        # [128, 64, 32, 16, 8, 4]
OUT_DIMS = LAYER_DIMS[1:]                        # [64, 32, 16, 8, 4, 2]
N_LAYERS = len(IN_DIMS)
OUT_DIM = LAYER_DIMS[-1]                         # 2
LANES = 128


def _round8(n):
    return (n + 7) // 8 * 8


# Row offset of each weight inside the packed (W_ROWS, 128) slab.
# W_i ([in_i, out_i]) lives at rows ROW_OFF[i] : ROW_OFF[i]+in_i, cols 0:out_i.
W_ROW_OFF = []
_off = 0
for _d in IN_DIMS:
    W_ROW_OFF.append(_off)
    _off += _round8(_d)
W_ROWS = _round8(_off)                           # 256


def _mlp_kernel(x1_ref, xres_ref, w_ref, b_ref, out_ref):
    # x1_ref:   (tm, 128) f32
    # xres_ref: (tm, 4)   f32   cols 0:2 = x2, cols 2:4 = x3
    # w_ref:    (256, 128) f32  packed weights (row-offset per layer)
    # b_ref:    (8, 128)  f32   row i = bias of layer i (zero padded)
    # out_ref:  (tm, 128) f32   cols 0:2 = x, cols 2:4 = y, rest 0
    h = x1_ref[...]
    for i in range(N_LAYERS):
        din, dout, roff = IN_DIMS[i], OUT_DIMS[i], W_ROW_OFF[i]
        w_i = w_ref[roff:roff + din, :dout]      # static VMEM slice of slab
        b_i = b_ref[i:i + 1, :dout]              # (1, dout) -> broadcasts
        h = jnp.dot(h, w_i, preferred_element_type=jnp.float32) + b_i
        if i < N_LAYERS - 1:                     # ReLU after all but last layer
            h = jnp.maximum(h, 0.0)

    x2 = xres_ref[:, 0:OUT_DIM]
    x3 = xres_ref[:, OUT_DIM:2 * OUT_DIM]
    x = h + x2
    y = jnp.maximum(x2, 0.0) + x3

    # Single lane-dense, unmasked 128-wide store.
    pad = jnp.zeros((x.shape[0], LANES - 2 * OUT_DIM), jnp.float32)
    out_ref[...] = jnp.concatenate([x, y, pad], axis=-1).astype(out_ref.dtype)


def pack_params(params):
    """Pack 6 (W [in,out], b [1,out]) pairs into one weight slab + one bias slab."""
    w_slab = jnp.zeros((W_ROWS, LANES), jnp.float32)
    b_slab = jnp.zeros((8, LANES), jnp.float32)
    for i, (w, b) in enumerate(params):
        din, dout = IN_DIMS[i], OUT_DIMS[i]
        w_slab = w_slab.at[W_ROW_OFF[i]:W_ROW_OFF[i] + din, :dout].set(
            w.astype(jnp.float32))
        b_slab = b_slab.at[i, :dout].set(b.reshape(dout).astype(jnp.float32))
    return w_slab, b_slab


def output_reused_forward(x1, x2, x3, x4, params, *, tm=None):
    """params: list of (W [in,out], b [1,out]) for the 6 Linear layers."""
    B = x1.shape[0]
    if tm is None:
        # Full batch as one block when small; 512-row tiles otherwise
        # (fits comfortably in v7x's 32 MiB scoped VMEM with double buffering).
        tm = B if B <= 512 else 512

    w_slab, b_slab = pack_params(params)
    xres = jnp.concatenate([x2, x3], axis=-1).astype(jnp.float32)   # (B, 4)

    flops = 2 * B * sum(di * do for di, do in zip(IN_DIMS, OUT_DIMS))
    bytes_accessed = 4 * (B * LANES          # x1
                          + B * 4            # packed x2/x3
                          + W_ROWS * LANES   # weight slab
                          + 8 * LANES        # bias slab
                          + B * LANES)       # fused output

    out = pl.pallas_call(
        _mlp_kernel,
        out_shape=jax.ShapeDtypeStruct((B, LANES), jnp.float32),
        grid_spec=pltpu.PrefetchScalarGridSpec(
            num_scalar_prefetch=0,
            grid=(pl.cdiv(B, tm),),
            in_specs=[
                pl.BlockSpec((tm, LANES), lambda i: (i, 0)),       # x1 tile
                pl.BlockSpec((tm, 4), lambda i: (i, 0)),           # x2|x3 tile
                pl.BlockSpec((W_ROWS, LANES), lambda i: (0, 0)),   # weight slab
                pl.BlockSpec((8, LANES), lambda i: (0, 0)),        # bias slab
            ],
            out_specs=pl.BlockSpec((tm, LANES), lambda i: (i, 0)),
        ),
        compiler_params=pltpu.CompilerParams(
            dimension_semantics=("parallel",),
        ),
        cost_estimate=pl.CostEstimate(
            flops=flops, transcendentals=0, bytes_accessed=bytes_accessed),
    )(x1.astype(jnp.float32), xres, w_slab, b_slab)

    x_out = out[:, 0:OUT_DIM]
    y_out = out[:, OUT_DIM:2 * OUT_DIM]
    # x3 and x4 are returned untouched by the module (pure graph pass-through).
    return x_out, y_out, x3, x4


def init_params(key):
    params = []
    for i in range(N_LAYERS):
        d_in, d_out = IN_DIMS[i], OUT_DIMS[i]
        key, kw, kb = jax.random.split(key, 3)
        bound = 1.0 / jnp.sqrt(d_in)   # PyTorch default Linear init scale
        w = jax.random.uniform(kw, (d_in, d_out), jnp.float32, -bound, bound)
        b = jax.random.uniform(kb, (1, d_out), jnp.float32, -bound, bound)
        params.append((w, b))
    return params


if __name__ == "__main__":
    key = jax.random.PRNGKey(0)
    key, k1, k2, k3, k4 = jax.random.split(key, 5)

    B = 8
    x1 = jax.random.normal(k1, (B, 128), jnp.float32)
    x2 = jax.random.normal(k2, (B, 2), jnp.float32)
    x3 = jax.random.normal(k3, (B, 2), jnp.float32)
    x4 = jax.random.normal(k4, (B, 2), jnp.float32)

    params = init_params(key)

    x_out, y_out, x3_out, x4_out = output_reused_forward(x1, x2, x3, x4, params)
    jax.block_until_ready((x_out, y_out, x3_out, x4_out))

    # Pure-JAX reference check of the kernel math.
    h = x1
    for i, (w, b) in enumerate(params):
        h = h @ w + b
        if i < len(params) - 1:
            h = jnp.maximum(h, 0.0)
    ref_x = h + x2
    ref_y = jnp.maximum(x2, 0.0) + x3
    assert jnp.allclose(x_out, ref_x, atol=1e-5), "x mismatch"
    assert jnp.allclose(y_out, ref_y, atol=1e-5), "y mismatch"
    assert jnp.array_equal(x3_out, x3) and jnp.array_equal(x4_out, x4)

    print("KERNEL_OK")
</pallas_src>

<mosaic_0001>
module attributes {stable_mosaic.version = 11 : i64} {
  func.func @_mlp_kernel(%arg0: i32, %arg1: memref<8x128xf32, #tpu.memory_space<vmem>>, %arg2: memref<8x4xf32, #tpu.memory_space<vmem>>, %arg3: memref<256x128xf32, #tpu.memory_space<vmem>>, %arg4: memref<8x128xf32, #tpu.memory_space<vmem>>, %arg5: memref<8x128xf32, #tpu.memory_space<vmem>>) attributes {dimension_semantics = [#tpu.dimension_semantics<parallel>], iteration_bounds = array<i64: 1>, scalar_prefetch = 0 : i64, scratch_operands = 0 : i64, tpu.core_type = #tpu.core_type<tc>, window_params = [{transform_indices = @transform_0, window_bounds = array<i64: 8, 128>}, {transform_indices = @transform_1, window_bounds = array<i64: 8, 4>}, {pipeline_mode = #tpu.pipeline_mode<synchronous>, transform_indices = @transform_2, window_bounds = array<i64: 256, 128>}, {pipeline_mode = #tpu.pipeline_mode<synchronous>, transform_indices = @transform_3, window_bounds = array<i64: 8, 128>}, {transform_indices = @transform_4, window_bounds = array<i64: 8, 128>}]} {
    %c0 = arith.constant 0 : index
    %c0_0 = arith.constant 0 : index
    %0 = vector.load %arg1[%c0, %c0_0] : memref<8x128xf32, #tpu.memory_space<vmem>>, vector<8x128xf32>
    %c0_1 = arith.constant 0 : index
    %c0_2 = arith.constant 0 : index
    %1 = vector.load %arg3[%c0_1, %c0_2] : memref<256x128xf32, #tpu.memory_space<vmem>>, vector<128x64xf32>
    %c0_3 = arith.constant 0 : index
    %c0_4 = arith.constant 0 : index
    %2 = vector.load %arg4[%c0_3, %c0_4] : memref<8x128xf32, #tpu.memory_space<vmem>>, vector<1x64xf32>
    %cst = arith.constant dense<0.000000e+00> : vector<8x64xf32>
    %3 = tpu.matmul %0, %1, %cst {dimension_numbers = #tpu.dot_dimension_numbers<[1], [0], [0], [1], [0, 0, 1, 1], [], []>} : vector<8x128xf32>, vector<128x64xf32>, vector<8x64xf32> -> vector<8x64xf32>
    %4 = vector.broadcast %2 : vector<1x64xf32> to vector<8x64xf32>
    %5 = arith.addf %3, %4 : vector<8x64xf32>
    %cst_5 = arith.constant 0.000000e+00 : f32
    %6 = vector.broadcast %cst_5 : f32 to vector<8x64xf32>
    %7 = arith.maximumf %5, %6 : vector<8x64xf32>
    %c128 = arith.constant 128 : index
    %c0_6 = arith.constant 0 : index
    %8 = vector.load %arg3[%c128, %c0_6] : memref<256x128xf32, #tpu.memory_space<vmem>>, vector<64x32xf32>
    %c1 = arith.constant 1 : index
    %c0_7 = arith.constant 0 : index
    %9 = vector.load %arg4[%c1, %c0_7] : memref<8x128xf32, #tpu.memory_space<vmem>>, vector<1x32xf32>
    %cst_8 = arith.constant dense<0.000000e+00> : vector<8x32xf32>
    %10 = tpu.matmul %7, %8, %cst_8 {dimension_numbers = #tpu.dot_dimension_numbers<[1], [0], [0], [1], [0, 0, 1, 1], [], []>} : vector<8x64xf32>, vector<64x32xf32>, vector<8x32xf32> -> vector<8x32xf32>
    %11 = vector.broadcast %9 : vector<1x32xf32> to vector<8x32xf32>
    %12 = arith.addf %10, %11 : vector<8x32xf32>
    %cst_9 = arith.constant 0.000000e+00 : f32
    %13 = vector.broadcast %cst_9 : f32 to vector<8x32xf32>
    %14 = arith.maximumf %12, %13 : vector<8x32xf32>
    %c192 = arith.constant 192 : index
    %c0_10 = arith.constant 0 : index
    %15 = vector.load %arg3[%c192, %c0_10] : memref<256x128xf32, #tpu.memory_space<vmem>>, vector<32x16xf32>
    %c2 = arith.constant 2 : index
    %c0_11 = arith.constant 0 : index
    %16 = vector.load %arg4[%c2, %c0_11] : memref<8x128xf32, #tpu.memory_space<vmem>>, vector<1x16xf32>
    %cst_12 = arith.constant dense<0.000000e+00> : vector<8x16xf32>
    %17 = tpu.matmul %14, %15, %cst_12 {dimension_numbers = #tpu.dot_dimension_numbers<[1], [0], [0], [1], [0, 0, 1, 1], [], []>} : vector<8x32xf32>, vector<32x16xf32>, vector<8x16xf32> -> vector<8x16xf32>
    %18 = vector.broadcast %16 : vector<1x16xf32> to vector<8x16xf32>
    %19 = arith.addf %17, %18 : vector<8x16xf32>
    %cst_13 = arith.constant 0.000000e+00 : f32
    %20 = vector.broadcast %cst_13 : f32 to vector<8x16xf32>
    %21 = arith.maximumf %19, %20 : vector<8x16xf32>
    %c224 = arith.constant 224 : index
    %c0_14 = arith.constant 0 : index
    %22 = vector.load %arg3[%c224, %c0_14] : memref<256x128xf32, #tpu.memory_space<vmem>>, vector<16x8xf32>
    %c3 = arith.constant 3 : index
    %c0_15 = arith.constant 0 : index
    %23 = vector.load %arg4[%c3, %c0_15] : memref<8x128xf32, #tpu.memory_space<vmem>>, vector<1x8xf32>
    %cst_16 = arith.constant dense<0.000000e+00> : vector<8x8xf32>
    %24 = tpu.matmul %21, %22, %cst_16 {dimension_numbers = #tpu.dot_dimension_numbers<[1], [0], [0], [1], [0, 0, 1, 1], [], []>} : vector<8x16xf32>, vector<16x8xf32>, vector<8x8xf32> -> vector<8x8xf32>
    %25 = vector.broadcast %23 : vector<1x8xf32> to vector<8x8xf32>
    %26 = arith.addf %24, %25 : vector<8x8xf32>
    %cst_17 = arith.constant 0.000000e+00 : f32
    %27 = vector.broadcast %cst_17 : f32 to vector<8x8xf32>
    %28 = arith.maximumf %26, %27 : vector<8x8xf32>
    %c240 = arith.constant 240 : index
    %c0_18 = arith.constant 0 : index
    %29 = vector.load %arg3[%c240, %c0_18] : memref<256x128xf32, #tpu.memory_space<vmem>>, vector<8x4xf32>
    %c4 = arith.constant 4 : index
    %c0_19 = arith.constant 0 : index
    %30 = vector.load %arg4[%c4, %c0_19] : memref<8x128xf32, #tpu.memory_space<vmem>>, vector<1x4xf32>
    %cst_20 = arith.constant dense<0.000000e+00> : vector<8x4xf32>
    %31 = tpu.matmul %28, %29, %cst_20 {dimension_numbers = #tpu.dot_dimension_numbers<[1], [0], [0], [1], [0, 0, 1, 1], [], []>} : vector<8x8xf32>, vector<8x4xf32>, vector<8x4xf32> -> vector<8x4xf32>
    %32 = vector.broadcast %30 : vector<1x4xf32> to vector<8x4xf32>
    %33 = arith.addf %31, %32 : vector<8x4xf32>
    %cst_21 = arith.constant 0.000000e+00 : f32
    %34 = vector.broadcast %cst_21 : f32 to vector<8x4xf32>
    %35 = arith.maximumf %33, %34 : vector<8x4xf32>
    %c248 = arith.constant 248 : index
    %c0_22 = arith.constant 0 : index
    %36 = vector.load %arg3[%c248, %c0_22] : memref<256x128xf32, #tpu.memory_space<vmem>>, vector<4x2xf32>
    %c5 = arith.constant 5 : index
    %c0_23 = arith.constant 0 : index
    %37 = vector.load %arg4[%c5, %c0_23] : memref<8x128xf32, #tpu.memory_space<vmem>>, vector<1x2xf32>
    %cst_24 = arith.constant dense<0.000000e+00> : vector<8x2xf32>
    %38 = tpu.matmul %35, %36, %cst_24 {dimension_numbers = #tpu.dot_dimension_numbers<[1], [0], [0], [1], [0, 0, 1, 1], [], []>} : vector<8x4xf32>, vector<4x2xf32>, vector<8x2xf32> -> vector<8x2xf32>
    %39 = vector.broadcast %37 : vector<1x2xf32> to vector<8x2xf32>
    %40 = arith.addf %38, %39 : vector<8x2xf32>
    %c0_25 = arith.constant 0 : index
    %c0_26 = arith.constant 0 : index
    %41 = vector.load %arg2[%c0_25, %c0_26] : memref<8x4xf32, #tpu.memory_space<vmem>>, vector<8x2xf32>
    %c0_27 = arith.constant 0 : index
    %c2_28 = arith.constant 2 : index
    %42 = vector.load %arg2[%c0_27, %c2_28] : memref<8x4xf32, #tpu.memory_space<vmem>>, vector<8x2xf32>
    %43 = arith.addf %40, %41 : vector<8x2xf32>
    %cst_29 = arith.constant 0.000000e+00 : f32
    %44 = vector.broadcast %cst_29 : f32 to vector<8x2xf32>
    %45 = arith.maximumf %41, %44 : vector<8x2xf32>
    %46 = arith.addf %45, %42 : vector<8x2xf32>
    %cst_30 = arith.constant 0.000000e+00 : f32
    %47 = vector.broadcast %cst_30 : f32 to vector<8x124xf32>
    %48 = tpu.concatenate %43, %46, %47 in 1 : vector<8x2xf32>, vector<8x2xf32>, vector<8x124xf32> -> vector<8x128xf32>
    %c0_31 = arith.constant 0 : index
    %c0_32 = arith.constant 0 : index
    %49 = vector.load %arg5[%c0_31, %c0_32] : memref<8x128xf32, #tpu.memory_space<vmem>>, vector<8x128xf32>
    tpu.vector_store %arg5[%c0_31, %c0_32], %48 {strides = array<i32>} : memref<8x128xf32, #tpu.memory_space<vmem>>, vector<8x128xf32>,
    return
  }
  func.func @transform_0(%arg0: i32) -> (i32, i32) {
    %c0_i32 = arith.constant 0 : i32
    %c0_i32_0 = arith.constant 0 : i32
    return %arg0, %c0_i32 : i32, i32
  }
  func.func @transform_1(%arg0: i32) -> (i32, i32) {
    %c0_i32 = arith.constant 0 : i32
    %c0_i32_0 = arith.constant 0 : i32
    return %arg0, %c0_i32 : i32, i32
  }
  func.func @transform_2(%arg0: i32) -> (i32, i32) {
    %c0_i32 = arith.constant 0 : i32
    %c0_i32_0 = arith.constant 0 : i32
    %c0_i32_1 = arith.constant 0 : i32
    return %c0_i32, %c0_i32_0 : i32, i32
  }
  func.func @transform_3(%arg0: i32) -> (i32, i32) {
    %c0_i32 = arith.constant 0 : i32
    %c0_i32_0 = arith.constant 0 : i32
    %c0_i32_1 = arith.constant 0 : i32
    return %c0_i32, %c0_i32_0 : i32, i32
  }
  func.func @transform_4(%arg0: i32) -> (i32, i32) {
    %c0_i32 = arith.constant 0 : i32
    %c0_i32_0 = arith.constant 0 : i32
    return %arg0, %c0_i32 : i32, i32
  }
}

</mosaic_0001>

<llo_original>
// kernel: tpu_custom_call.1
$region0: #{tpu_custom_call.1}
  #allocation0 [shape = 'u32[]', space=smem, size = 0x4, offset = 0x4, fixed_abs, tag = 'smem constant byte address 0x4 - core index']
  #allocation1 [shape = 'u32[72,128]{1,0:T(1,128)}', space=vmem, size = 0x9000, scoped, tag = 'internal scratch']
  %s0 = inlined_call_operand.vmem [shape: f32[8,128], index: 0, kind: input, shape index: {}]
  %s1 = inlined_call_operand.vmem [shape: f32[8,4], index: 1, kind: input, shape index: {}]
  %s2 = inlined_call_operand.hbm [shape: f32[256,128], index: 2, kind: input, shape index: {}]
  %s3 = inlined_call_operand.hbm [shape: f32[8,128], index: 3, kind: input, shape index: {}]
  %s4 = inlined_call_operand.hbm [shape: f32[8,128], index: 4, kind: output, shape index: {}]
  %s5 = sld [smem:[#allocation0]]
  $region34: #{tpu_custom_call.1} parent=0
    _
  %s7 = ssub.s32 1, %s5
  %s8 = scalar_select 0, %s7, %s5
  $region1: #{tpu_custom_call.1} parent=0
    #allocation2 [shape = 'u8[131072]{0}', space=vmem, size = 0x20000, scoped, tag = 'input window, operand 2, single buffered']
    #allocation3 [shape = 's32[1]{0}', space=sflag, size = 0x4, scoped, tag = 'scoped memory for tpu_custom_call.1']
    #allocation4 [shape = 's32[1]{0}', space=sflag, size = 0x4, scoped, tag = 'scoped memory for tpu_custom_call.1']
    #allocation5 [shape = 'u8[4096]{0}', space=vmem, size = 0x1000, scoped, tag = 'input window, operand 3, single buffered']
    #allocation6 [shape = 's32[1]{0}', space=sflag, size = 0x4, scoped, tag = 'scoped memory for tpu_custom_call.1']
    #allocation7 [shape = 'u8[4096]{0}', space=vmem, size = 0x1000, scoped, tag = 'output window, operand 0, single buffered']
    %9 = vsyncpa [#allocation3], 0
    %10 = vsyncpa [#allocation6], 0
    %11 = vsyncpa [#allocation4], 0
    // Predicated region
    $region2: #{tpu_custom_call.1} parent=1 // pred_check
      _
    $region3: #{tpu_custom_call.1} parent=1 // pred_check_branch
      %13 = sbr.rel (0) target = $region5
    $region4: #{tpu_custom_call.1} parent=1 // pred_region
      _
    $region5: #{tpu_custom_call.1} parent=1 // pred_fallthru
      _
    // Predicated region
    $region6: #{tpu_custom_call.1} parent=1 // pred_check
      _
    $region7: #{tpu_custom_call.1} parent=1 // pred_check_branch
      %15 = sbr.rel (0) target = $region9
    $region8: #{tpu_custom_call.1} parent=1 // pred_region
      _
    $region9: #{tpu_custom_call.1} parent=1 // pred_fallthru
      _
    // Predicated region
    $region10: #{tpu_custom_call.1} parent=1 // pred_check
      _
    $region11: #{tpu_custom_call.1} parent=1 // pred_check_branch
      %17 = sbr.rel (0) target = $region13
    $region12: #{tpu_custom_call.1} parent=1 // pred_region
      %19 = vsyncadd [#allocation3], 0
      %s20 = sshll.u32 %s2, 4
      %s21 = int_to_ptr.hbm [resolvable:$true] %s20
      %s22 = sshll.u32 [#allocation2], 4
      %s23 = int_to_ptr.vmem [resolvable:$true] %s22
      %28 = dma.hbm_to_vmem [thread:$0]  %s21, 4096, %s23, [#allocation3], 128, 128, 8
    $region13: #{tpu_custom_call.1} parent=1 // pred_fallthru
      _
    // Predicated region
    $region14: #{tpu_custom_call.1} parent=1 // pred_check
      _
    $region15: #{tpu_custom_call.1} parent=1 // pred_check_branch
      %30 = sbr.rel (0) target = $region17
    $region16: #{tpu_custom_call.1} parent=1 // pred_region
      %32 = vsyncadd [#allocation6], 0
      %s34 = sshll.u32 %s3, 4
      %s35 = int_to_ptr.hbm [resolvable:$true] %s34
      %s36 = sshll.u32 [#allocation5], 4
      %s37 = int_to_ptr.vmem [resolvable:$true] %s36
      %39 = dma.hbm_to_vmem [thread:$0]  %s35, 128, %s37, [#allocation6]
    $region17: #{tpu_custom_call.1} parent=1 // pred_fallthru
      _
    // Predicated region
    $region18: #{tpu_custom_call.1} parent=1 // pred_check
      _
    $region19: #{tpu_custom_call.1} parent=1 // pred_check_branch
      %41 = sbr.rel (0) target = $region21
    $region20: #{tpu_custom_call.1} parent=1 // pred_region
      %43 = dma.done [#allocation3], 4096
    $region21: #{tpu_custom_call.1} parent=1 // pred_fallthru
      _
    // Predicated region
    $region22: #{tpu_custom_call.1} parent=1 // pred_check
      _
    $region23: #{tpu_custom_call.1} parent=1 // pred_check_branch
      %45 = sbr.rel (0) target = $region25
    $region24: #{tpu_custom_call.1} parent=1 // pred_region
      %47 = dma.done [#allocation6], 128
    $region25: #{tpu_custom_call.1} parent=1 // pred_fallthru
      _
    %v48 = vld [vmem:[%s0] sm:$0xff]
    %v49 = vld [vmem:[#allocation2] sm:$0xff]
    %v50 = vld [vmem:[#allocation2 + $0x8] sm:$0xff]
    %v51 = vld [vmem:[#allocation2 + $0x10] sm:$0xff]
    %v52 = vld [vmem:[#allocation2 + $0x18] sm:$0xff]
    %v53 = vld [vmem:[#allocation2 + $0x20] sm:$0xff]
    %v54 = vld [vmem:[#allocation2 + $0x28] sm:$0xff]
    %v55 = vld [vmem:[#allocation2 + $0x30] sm:$0xff]
    %v56 = vld [vmem:[#allocation2 + $0x38] sm:$0xff]
    %v57 = vld [vmem:[#allocation2 + $0x40] sm:$0xff]
    %v58 = vld [vmem:[#allocation2 + $0x48] sm:$0xff]
    %v59 = vld [vmem:[#allocation2 + $0x50] sm:$0xff]
    %v60 = vld [vmem:[#allocation2 + $0x58] sm:$0xff]
    %v61 = vld [vmem:[#allocation2 + $0x60] sm:$0xff]
    %v62 = vld [vmem:[#allocation2 + $0x68] sm:$0xff]
    %v63 = vld [vmem:[#allocation2 + $0x70] sm:$0xff]
    %v64 = vld [vmem:[#allocation2 + $0x78] sm:$0xff]
    %v65 = vld [vmem:[#allocation5] sm:$0x1]
    %v66 = vperm.slane %v65, 0
    %67 = vmatpush.msra.mxu0 %v64
    %68 = vmatpush.msra.mxu0 %v63
    %69 = vmatpush.msra.mxu0 %v62
    %70 = vmatpush.msra.mxu0 %v61
    %71 = vmatpush.msra.mxu0 %v60
    %72 = vmatpush.msra.mxu0 %v59
    %73 = vmatpush.msra.mxu0 %v58
    %74 = vmatpush.msra.mxu0 %v57
    %75 = vmatpush.msra.mxu0 %v56
    %76 = vmatpush.msra.mxu0 %v55
    %77 = vmatpush.msra.mxu0 %v54
    %78 = vmatpush.msra.mxu0 %v53
    %79 = vmatpush.msra.mxu0 %v52
    %80 = vmatpush.msra.mxu0 %v51
    %81 = vmatpush.msra.mxu0 %v50
    %82 = vmatpush.msra.mxu0 %v49
    %83 = vmatmul.f32.gmra.mxu0 %v48
    %v84 = vpop.f32.mrf.mxu0
    %v85 = vadd.f32 %v66, %v84
    %86 = vdwg.mxu0
    %v87 = vmax.f32 %v85, 0.0
    %v88 = vld [vmem:[#allocation2 + $0x80] sm:$0xff]
    %v89 = vld [vmem:[#allocation2 + $0x88] sm:$0xff]
    %v90 = vld [vmem:[#allocation2 + $0x90] sm:$0xff]
    %v91 = vld [vmem:[#allocation2 + $0x98] sm:$0xff]
    %v92 = vld [vmem:[#allocation2 + $0xa0] sm:$0xff]
    %v93 = vld [vmem:[#allocation2 + $0xa8] sm:$0xff]
    %v94 = vld [vmem:[#allocation2 + $0xb0] sm:$0xff]
    %v95 = vld [vmem:[#allocation2 + $0xb8] sm:$0xff]
    %v96 = vld [vmem:[#allocation5 + $0x1] sm:$0x1]
    %v97 = vperm.slane %v96, 0
    %vm98 = vcmask 523264
    %v100 = vsel %vm98, %v87, 0
    %102 = vmatpush.msra.mxu0 0.0
    %103 = vmatpush.msra.mxu0 0.0
    %104 = vmatpush.msra.mxu0 0.0
    %105 = vmatpush.msra.mxu0 0.0
    %106 = vmatpush.msra.mxu0 0.0
    %107 = vmatpush.msra.mxu0 0.0
    %108 = vmatpush.msra.mxu0 0.0
    %109 = vmatpush.msra.mxu0 0.0
    %110 = vmatpush.msra.mxu0 %v95
    %111 = vmatpush.msra.mxu0 %v94
    %112 = vmatpush.msra.mxu0 %v93
    %113 = vmatpush.msra.mxu0 %v92
    %114 = vmatpush.msra.mxu0 %v91
    %115 = vmatpush.msra.mxu0 %v90
    %116 = vmatpush.msra.mxu0 %v89
    %117 = vmatpush.msra.mxu0 %v88
    %118 = vmatmul.f32.gmra.mxu0 %v100
    %v119 = vpop.f32.mrf.mxu0
    %v120 = vadd.f32 %v97, %v119
    %121 = vdwg.mxu0
    %v122 = vmax.f32 %v120, 0.0
    %v123 = vld [vmem:[#allocation2 + $0xc0] sm:$0xff]
    %v124 = vld [vmem:[#allocation2 + $0xc8] sm:$0xff]
    %v125 = vld [vmem:[#allocation2 + $0xd0] sm:$0xff]
    %v126 = vld [vmem:[#allocation2 + $0xd8] sm:$0xff]
    %v127 = vld [vmem:[#allocation5 + $0x2] sm:$0x1]
    %v128 = vperm.slane %v127, 0
    %vm129 = vcmask 261120
    %v131 = vsel %vm129, %v122, 0
    %133 = vmatpush.msra.mxu0 0.0
    %134 = vmatpush.msra.mxu0 0.0
    %135 = vmatpush.msra.mxu0 0.0
    %136 = vmatpush.msra.mxu0 0.0
    %137 = vmatpush.msra.mxu0 0.0
    %138 = vmatpush.msra.mxu0 0.0
    %139 = vmatpush.msra.mxu0 0.0
    %140 = vmatpush.msra.mxu0 0.0
    %141 = vmatpush.msra.mxu0 0.0
    %142 = vmatpush.msra.mxu0 0.0
    %143 = vmatpush.msra.mxu0 0.0
    %144 = vmatpush.msra.mxu0 0.0
    %145 = vmatpush.msra.mxu0 %v126
    %146 = vmatpush.msra.mxu0 %v125
    %147 = vmatpush.msra.mxu0 %v124
    %148 = vmatpush.msra.mxu0 %v123
    %149 = vmatmul.f32.gmra.mxu0 %v131
    %v150 = vpop.f32.mrf.mxu0
    %v151 = vadd.f32 %v128, %v150
    %152 = vdwg.mxu0
    %v153 = vmax.f32 %v151, 0.0
    %v154 = vld [vmem:[#allocation2 + $0xe0] sm:$0xff]
    %v155 = vld [vmem:[#allocation2 + $0xe8] sm:$0xff]
    %v156 = vld [vmem:[#allocation5 + $0x3] sm:$0x1]
    %v157 = vperm.slane %v156, 0
    %vm158 = vcmask 130048
    %v160 = vsel %vm158, %v153, 0
    %162 = vmatpush.msra.mxu0 0.0
    %163 = vmatpush.msra.mxu0 0.0
    %164 = vmatpush.msra.mxu0 0.0
    %165 = vmatpush.msra.mxu0 0.0
    %166 = vmatpush.msra.mxu0 0.0
    %167 = vmatpush.msra.mxu0 0.0
    %168 = vmatpush.msra.mxu0 0.0
    %169 = vmatpush.msra.mxu0 0.0
    %170 = vmatpush.msra.mxu0 0.0
    %171 = vmatpush.msra.mxu0 0.0
    %172 = vmatpush.msra.mxu0 0.0
    %173 = vmatpush.msra.mxu0 0.0
    %174 = vmatpush.msra.mxu0 0.0
    %175 = vmatpush.msra.mxu0 0.0
    %176 = vmatpush.msra.mxu0 %v155
    %177 = vmatpush.msra.mxu0 %v154
    %178 = vmatmul.f32.gmra.mxu0 %v160
    %v179 = vpop.f32.mrf.mxu0
    %v180 = vadd.f32 %v157, %v179
    %181 = vdwg.mxu0
    %v182 = vmax.f32 %v180, 0.0
    %v183 = vld [vmem:[#allocation2 + $0xf0] sm:$0xff]
    %v184 = vld [vmem:[#allocation5 + $0x4] sm:$0x1]
    %v185 = vperm.slane %v184, 0
    %vm186 = vcmask 64512
    %v188 = vsel %vm186, %v182, 0
    %190 = vmatpush.msra.mxu0 0.0
    %191 = vmatpush.msra.mxu0 0.0
    %192 = vmatpush.msra.mxu0 0.0
    %193 = vmatpush.msra.mxu0 0.0
    %194 = vmatpush.msra.mxu0 0.0
    %195 = vmatpush.msra.mxu0 0.0
    %196 = vmatpush.msra.mxu0 0.0
    %197 = vmatpush.msra.mxu0 0.0
    %198 = vmatpush.msra.mxu0 0.0
    %199 = vmatpush.msra.mxu0 0.0
    %200 = vmatpush.msra.mxu0 0.0
    %201 = vmatpush.msra.mxu0 0.0
    %202 = vmatpush.msra.mxu0 0.0
    %203 = vmatpush.msra.mxu0 0.0
    %204 = vmatpush.msra.mxu0 0.0
    %205 = vmatpush.msra.mxu0 %v183
    %206 = vmatmul.f32.gmra.mxu0 %v188
    %v207 = vpop.f32.mrf.mxu0
    %v208 = vadd.f32 %v185, %v207
    %209 = vdwg.mxu0
    %v210 = vmax.f32 %v208, 0.0
    %v211 = vld [vmem:[#allocation2 + $0xf8] sm:$0xf]
    %v212 = vld [vmem:[#allocation5 + $0x5] sm:$0x1]
    %v213 = vperm.slane %v212, 0
    %vm214 = vcmask 31744
    %v216 = vsel %vm214, %v210, 0
    %vm218 = vcmask 1043456
    %v220 = vsel %vm218, %v211, 0
    %222 = vmatpush.msra.mxu0 0.0
    %223 = vmatpush.msra.mxu0 0.0
    %224 = vmatpush.msra.mxu0 0.0
    %225 = vmatpush.msra.mxu0 0.0
    %226 = vmatpush.msra.mxu0 0.0
    %227 = vmatpush.msra.mxu0 0.0
    %228 = vmatpush.msra.mxu0 0.0
    %229 = vmatpush.msra.mxu0 0.0
    %230 = vmatpush.msra.mxu0 0.0
    %231 = vmatpush.msra.mxu0 0.0
    %232 = vmatpush.msra.mxu0 0.0
    %233 = vmatpush.msra.mxu0 0.0
    %234 = vmatpush.msra.mxu0 0.0
    %235 = vmatpush.msra.mxu0 0.0
    %236 = vmatpush.msra.mxu0 0.0
    %237 = vmatpush.msra.mxu0 %v220
    %238 = vmatmul.f32.gmra.mxu0 %v216
    %v239 = vpop.f32.mrf.mxu0
    %v240 = vadd.f32 %v213, %v239
    %241 = vdwg.mxu0
    %v242 = vld [vmem:[%s1] sm:$0xff]
    %v243 = vadd.f32 %v240, %v242
    %v244 = vmax.f32 %v242, 0.0
    %246 = vrot.lane.b32.xlu0 %v242, 126
    %v247 = vpop.permute.xlu0 %246
    %v249 = vadd.f32 %v244, %v247
    %251 = vrot.lane.b32.xlu0 %v249, 2
    %v252 = vpop.permute.xlu0 %251
    %vm254 = vcmask 15360
    %v255 = vsel %vm254, %v243, %v252
    %v256 = vsel %vm214, %v255, 0.0
    %257 = vst [vmem:[#allocation7] sm:$0xff] %v256
    // Predicated region
    $region26: #{tpu_custom_call.1} parent=1 // pred_check
      _
    $region27: #{tpu_custom_call.1} parent=1 // pred_check_branch
      %259 = sbr.rel (0) target = $region29
    $region28: #{tpu_custom_call.1} parent=1 // pred_region
      %261 = vsyncadd [#allocation4], 0
      %s263 = sshll.u32 [#allocation7], 4
      %s264 = int_to_ptr.vmem [resolvable:$true] %s263
      %s265 = sshll.u32 %s4, 4
      %s266 = int_to_ptr.hbm [resolvable:$true] %s265
      %268 = dma.vmem_to_hbm [thread:$0]  %s264, 128, %s266, [#allocation4]
    $region29: #{tpu_custom_call.1} parent=1 // pred_fallthru
      _
    // Predicated region
    $region30: #{tpu_custom_call.1} parent=1 // pred_check
      _
    $region31: #{tpu_custom_call.1} parent=1 // pred_check_branch
      %270 = sbr.rel (0) target = $region33
    $region32: #{tpu_custom_call.1} parent=1 // pred_region
      %272 = dma.done [#allocation4], 128
    $region33: #{tpu_custom_call.1} parent=1 // pred_fallthru
      _
    %273 = vsyncpa [#allocation3], 1
    %274 = vsyncpa [#allocation6], 1
    %275 = vsyncpa [#allocation4], 1

</llo_original>
